<compile_context>
chip_gen: v5e
topology: v5e:2x2
jax: 0.10.0
libtpu: 0.0.40
codegen_flags: <defaults>
</compile_context>

<pallas_src>
import functools
import math

import jax
import jax.numpy as jnp
from jax import lax
from jax.experimental import pallas as pl
from jax.experimental.pallas import tpu as pltpu

LANES = 128


def _round_up(x, m):
    return ((x + m - 1) // m) * m


def _dice_partial_kernel(pred_ref, tgt_ref, out_ref, acc_ref, *opt_scratch,
                         n_classes, tile_rows, chunk_rows, acc_rows, num_tiles,
                         valid_voxels, mask_mode, unpack_labels):
    # pred_ref : (1, C, TR, 128) logits (native dtype)
    # tgt_ref  : (1, TR, 128) integer class labels (native int dtype)
    # out_ref  : (1, 3, C, AR, 128) f32 fused partial sums [inter, sum(p*p), sum(t)]
    # acc_ref  : (3, C, AR, 128) f32 scratch accumulator (dense vregs)
    # opt_scratch: optional (TR, 128) int32 scratch for unpacked labels
    C, TR, RC, AR = n_classes, tile_rows, chunk_rows, acc_rows
    s = pl.program_id(1)

    @pl.when(s == 0)
    def _():
        acc_ref[...] = jnp.zeros_like(acc_ref)

    if unpack_labels:
        # unpack packed (int8/int16/uint8) labels once per tile; chunk loads below then
        # slice plain int32 (avoids dynamic sub-tile slicing of packed dtypes).
        tgt32_ref = opt_scratch[0]
        tgt32_ref[...] = tgt_ref[0].astype(jnp.int32)

        def load_labels(row0, rows):
            return tgt32_ref[pl.ds(row0, rows), :]
    else:
        def load_labels(row0, rows):
            return tgt_ref[0, pl.ds(row0, rows), :]

    def fold_rows(acc, x):
        # accumulate a (C, r, 128) chunk into the (C, AR, 128) accumulator using
        # whole-vreg adds only (no cross-lane / cross-sublane work).
        r = x.shape[1]
        for k in range(r // AR):
            acc = acc + x[:, k * AR:(k + 1) * AR, :]
        rem = r % AR
        if rem:
            acc = acc.at[:, :rem, :].add(x[:, r - rem:, :])
        return acc

    def chunk_update(carry, row0, rows, masked):
        inter_acc, psq_acc, oh_acc = carry
        logits = pred_ref[0, :, pl.ds(row0, rows), :].astype(jnp.float32)  # (C, rows, 128)
        labels = load_labels(row0, rows).astype(jnp.int32)                 # (rows, 128)
        if masked:
            gpos = ((s * TR + row0
                     + lax.broadcasted_iota(jnp.int32, (rows, LANES), 0)) * LANES
                    + lax.broadcasted_iota(jnp.int32, (rows, LANES), 1))
            mask = gpos < valid_voxels
            # mask the logits BEFORE exp so padded / OOB garbage stays finite (no NaN).
            logits = jnp.where(mask[None], logits, 0.0)
        # softmax over the class axis == elementwise max/sum across the C dense slabs.
        m = jnp.max(logits, axis=0, keepdims=True)                         # (1, rows, 128)
        e = jnp.exp(logits - m)
        denom = jnp.sum(e, axis=0, keepdims=True)
        p = e * pl.reciprocal(denom, approx=True)                          # (C, rows, 128)
        cls = lax.broadcasted_iota(jnp.int32, (C, rows, LANES), 0)
        onehot = (labels[None] == cls).astype(jnp.float32)                 # (C, rows, 128)
        if masked:
            fmask = mask.astype(jnp.float32)[None]
            p = p * fmask
            onehot = onehot * fmask
        return (fold_rows(inter_acc, p * onehot),
                fold_rows(psq_acc, p * p),
                fold_rows(oh_acc, onehot))

    def tile_body(masked):
        zero = jnp.zeros((C, AR, LANES), jnp.float32)
        carry = (zero, zero, zero)
        n_full = TR // RC
        if n_full > 1:
            def body(i, c):
                row0 = pl.multiple_of(i * RC, RC)
                return chunk_update(c, row0, RC, masked)
            carry = lax.fori_loop(0, n_full, body, carry, unroll=2)
        else:
            carry = chunk_update(carry, 0, RC, masked)
        rem = TR - n_full * RC
        if rem:  # static ragged tail chunk (only for odd tile shapes)
            carry = chunk_update(carry, n_full * RC, rem, masked)
        acc_ref[0] += carry[0]
        acc_ref[1] += carry[1]
        acc_ref[2] += carry[2]

    if mask_mode == "none":
        tile_body(masked=False)
    elif mask_mode == "all":          # single spatial tile that contains padding
        tile_body(masked=True)
    else:                             # "tail": only the last spatial tile has padding / OOB
        @pl.when(s < num_tiles - 1)
        def _():
            tile_body(masked=False)

        @pl.when(s == num_tiles - 1)
        def _():
            tile_body(masked=True)

    @pl.when(s == num_tiles - 1)
    def _():
        out_ref[0] = acc_ref[...]


@functools.partial(jax.jit, static_argnames=("epsilon", "tile_rows"))
def dice_loss(pred, target, *, epsilon=1e-5, tile_rows=256):
    """Pallas equivalent of DiceLoss(to_onehot_y=True, softmax=True).forward(pred, target)."""
    assert tile_rows % 32 == 0, "tile_rows must be a multiple of 32"
    assert jnp.issubdtype(target.dtype, jnp.integer), "target must hold integer class ids"
    N, C = pred.shape[0], pred.shape[1]
    spatial = tuple(pred.shape[2:])
    assert target.shape == (N,) + spatial
    S = math.prod(spatial)

    S_pad = _round_up(S, LANES)
    R = S_pad // LANES

    pred_r = pred.reshape(N, C, S)          # native dtype, no upcast
    tgt_r = target.reshape(N, S)            # native int dtype, no forced int32
    if S_pad != S:
        # TODO(synk): this pad is a full HBM copy of the logits; it is only taken when the
        # flattened volume is not a multiple of 128 (the lane-dense re-layout needs whole
        # 128-lane rows). Padded voxels are masked out inside the kernel (tail tile only).
        pred_r = jnp.pad(pred_r, ((0, 0), (0, 0), (0, S_pad - S)))
        tgt_r = jnp.pad(tgt_r, ((0, 0), (0, S_pad - S)), constant_values=C)  # C == "no class"
    pred_r = pred_r.reshape(N, C, R, LANES)  # free reshape: (rows, 128) vreg-dense layout
    tgt_r = tgt_r.reshape(N, R, LANES)

    TR = R if R <= tile_rows else tile_rows  # rows of 128 voxels per grid step
    num_tiles = -(-R // TR)
    AR = 8 if TR >= 8 else TR                # accumulator rows (dense vregs)
    RC = min(TR, 16 if C <= 8 else 8)        # rows per fused inner chunk (keeps live set small)

    needs_mask = (S != S_pad) or (num_tiles * TR != R)
    mask_mode = "none" if not needs_mask else ("all" if num_tiles == 1 else "tail")
    unpack_labels = tgt_r.dtype != jnp.int32

    kernel = functools.partial(
        _dice_partial_kernel,
        n_classes=C, tile_rows=TR, chunk_rows=RC, acc_rows=AR,
        num_tiles=num_tiles, valid_voxels=S, mask_mode=mask_mode,
        unpack_labels=unpack_labels)

    scratch_shapes = [pltpu.VMEM((3, C, AR, LANES), jnp.float32)]
    if unpack_labels:
        scratch_shapes.append(pltpu.VMEM((TR, LANES), jnp.int32))

    pred_blk = C * TR * LANES * pred_r.dtype.itemsize
    tgt_blk = TR * LANES * tgt_r.dtype.itemsize
    out_blk = 3 * C * AR * LANES * 4
    # actual double-buffered footprint + headroom; never request the whole v7x VMEM.
    vmem_limit = int(min(32 * 2**20, max(4 * 2**20, 4 * (pred_blk + tgt_blk + out_blk))))

    cost = pl.CostEstimate(
        flops=int(12 * N * C * S),
        transcendentals=int(N * S * (C + 1)),
        bytes_accessed=int(N * C * S_pad * pred_r.dtype.itemsize
                           + N * S_pad * tgt_r.dtype.itemsize
                           + N * out_blk),
    )

    # TODO(synk): for N == 1 on multi-TensorCore chips (v7x) add a leading CORE_PARALLEL
    # split of the spatial reduction so both TensorCores get work.
    partials = pl.pallas_call(
        kernel,
        out_shape=jax.ShapeDtypeStruct((N, 3, C, AR, LANES), jnp.float32),
        grid_spec=pltpu.PrefetchScalarGridSpec(
            num_scalar_prefetch=0,
            grid=(N, num_tiles),
            in_specs=[
                pl.BlockSpec((1, C, TR, LANES), lambda n, t: (n, 0, t, 0)),
                pl.BlockSpec((1, TR, LANES), lambda n, t: (n, t, 0)),
            ],
            out_specs=pl.BlockSpec((1, 3, C, AR, LANES),
                                   lambda n, t: (n, 0, 0, 0, 0)),
            scratch_shapes=scratch_shapes),
        compiler_params=pltpu.CompilerParams(
            dimension_semantics=("parallel", "arbitrary"),
            vmem_limit_bytes=vmem_limit),
        cost_estimate=cost,
    )(pred_r, tgt_r)

    # tiny (N, 3, C) finalization in plain JAX
    sums = partials.sum(axis=(3, 4))              # (N, 3, C)
    intersect = sums[:, 0]                        # (N, C)
    denominator = sums[:, 1] + sums[:, 2]         # (N, C)
    dice_score = 2.0 * intersect / (denominator + epsilon)
    return 1.0 - dice_score.mean()


def _dice_loss_ref(pred, target, epsilon=1e-5):
    """Pure-JAX reference mirroring the PyTorch forward."""
    n_classes = pred.shape[1]
    p = jax.nn.softmax(pred.astype(jnp.float32), axis=1)
    t = jax.nn.one_hot(target, n_classes, dtype=jnp.float32)      # (N, D, H, W, C)
    t = jnp.transpose(t, (0, 4, 1, 2, 3))                          # (N, C, D, H, W)
    N, C = p.shape[0], p.shape[1]
    p = p.reshape(N, C, -1)
    t = t.reshape(N, C, -1)
    intersect = (p * t).sum(-1)
    denom = (p * p).sum(-1) + (t * t).sum(-1)
    dice = 2.0 * intersect / (denom + epsilon)
    return 1.0 - dice.mean()


if __name__ == "__main__":
    key = jax.random.PRNGKey(0)
    k1, k2 = jax.random.split(key)

    # 1) f32 logits, int32 labels, S a multiple of 128 (no padding, single tile per batch elem)
    N, C, D, H, W = 2, 4, 8, 8, 8
    pred = jax.random.normal(k1, (N, C, D, H, W), jnp.float32)
    target = jax.random.randint(k2, (N, D, H, W), 0, C, dtype=jnp.int32)
    loss = jax.block_until_ready(dice_loss(pred, target))
    ref = jax.block_until_ready(_dice_loss_ref(pred, target))
    assert jnp.allclose(loss, ref, rtol=5e-3, atol=2e-3), (loss, ref)

    # 2) bf16 logits + int8 labels, multi-tile spatial grid with OOB rows in the tail tile
    N2, C2, D2, H2, W2 = 1, 4, 6, 32, 32          # S = 6144 = 48 * 128
    pred2 = jax.random.normal(k1, (N2, C2, D2, H2, W2), jnp.float32).astype(jnp.bfloat16)
    target2 = jax.random.randint(k2, (N2, D2, H2, W2), 0, C2, dtype=jnp.int32).astype(jnp.int8)
    loss2 = jax.block_until_ready(dice_loss(pred2, target2, tile_rows=32))
    ref2 = jax.block_until_ready(_dice_loss_ref(pred2, target2))
    assert jnp.allclose(loss2, ref2, rtol=1e-2, atol=5e-3), (loss2, ref2)

    # 3) ragged spatial extent (S % 128 != 0): lane padding + always-masked single tile
    N3, C3, D3, H3, W3 = 1, 3, 5, 7, 9
    pred3 = jax.random.normal(k1, (N3, C3, D3, H3, W3), jnp.float32)
    target3 = jax.random.randint(k2, (N3, D3, H3, W3), 0, C3, dtype=jnp.int32)
    loss3 = jax.block_until_ready(dice_loss(pred3, target3))
    ref3 = jax.block_until_ready(_dice_loss_ref(pred3, target3))
    assert jnp.allclose(loss3, ref3, rtol=5e-3, atol=2e-3), (loss3, ref3)

    print("KERNEL_OK")
</pallas_src>

<mosaic_0001>
module attributes {stable_mosaic.version = 11 : i64} {
  func.func @_dice_partial_kernel(%arg0: i32, %arg1: i32, %arg2: memref<1x4x4x128xf32, #tpu.memory_space<vmem>>, %arg3: memref<1x4x128xi32, #tpu.memory_space<vmem>>, %arg4: memref<1x3x4x4x128xf32, #tpu.memory_space<vmem>>, %arg5: memref<3x4x4x128xf32, #tpu.memory_space<vmem>>) attributes {dimension_semantics = [#tpu.dimension_semantics<parallel>, #tpu.dimension_semantics<arbitrary>], iteration_bounds = array<i64: 2, 1>, scalar_prefetch = 0 : i64, scratch_operands = 1 : i64, tpu.core_type = #tpu.core_type<tc>, window_params = [{transform_indices = @transform_0, window_bounds = array<i64: 1, 4, 4, 128>}, {transform_indices = @transform_1, window_bounds = array<i64: 1, 4, 128>}, {transform_indices = @transform_2, window_bounds = array<i64: 1, 3, 4, 4, 128>}]} {
    %c0_i32 = arith.constant 0 : i32
    %0 = arith.cmpi eq, %arg1, %c0_i32 : i32
    %1 = arith.extui %0 : i1 to i32
    %c0_i32_0 = arith.constant 0 : i32
    %2 = arith.cmpi ne, %1, %c0_i32_0 : i32
    scf.if %2 {
      %cst_33 = arith.constant 0.000000e+00 : f32
      %50 = vector.broadcast %cst_33 : f32 to vector<3x4x4x128xf32>
      %c0_34 = arith.constant 0 : index
      %c0_35 = arith.constant 0 : index
      %c0_36 = arith.constant 0 : index
      %c0_37 = arith.constant 0 : index
      %51 = vector.load %arg5[%c0_34, %c0_35, %c0_36, %c0_37] : memref<3x4x4x128xf32, #tpu.memory_space<vmem>>, vector<3x4x4x128xf32>
      tpu.vector_store %arg5[%c0_34, %c0_35, %c0_36, %c0_37], %50 {strides = array<i32>} : memref<3x4x4x128xf32, #tpu.memory_space<vmem>>, vector<3x4x4x128xf32>,
    } else {
    }
    %cst = arith.constant 0.000000e+00 : f32
    %3 = vector.broadcast %cst : f32 to vector<4x4x128xf32>
    %c0 = arith.constant 0 : index
    %c0_1 = arith.constant 0 : index
    %c0_2 = arith.constant 0 : index
    %c0_3 = arith.constant 0 : index
    %4 = vector.load %arg2[%c0, %c0_1, %c0_2, %c0_3] : memref<1x4x4x128xf32, #tpu.memory_space<vmem>>, vector<1x4x4x128xf32>
    %5 = vector.shape_cast %4 : vector<1x4x4x128xf32> to vector<4x4x128xf32>
    %c0_4 = arith.constant 0 : index
    %c0_5 = arith.constant 0 : index
    %c0_6 = arith.constant 0 : index
    %6 = vector.load %arg3[%c0_4, %c0_5, %c0_6] : memref<1x4x128xi32, #tpu.memory_space<vmem>>, vector<1x4x128xi32>
    %7 = vector.shape_cast %6 : vector<1x4x128xi32> to vector<4x128xi32>
    %cst_7 = arith.constant dense<0xFF800000> : vector<4x128xf32>
    %8 = vector.multi_reduction <maximumf>, %5, %cst_7 [0] : vector<4x4x128xf32> to vector<4x128xf32>
    %9 = vector.shape_cast %8 : vector<4x128xf32> to vector<1x4x128xf32>
    %10 = vector.broadcast %9 : vector<1x4x128xf32> to vector<4x4x128xf32>
    %11 = arith.subf %5, %10 : vector<4x4x128xf32>
    %12 = math.exp %11 : vector<4x4x128xf32>
    %cst_8 = arith.constant dense<0.000000e+00> : vector<4x128xf32>
    %13 = vector.multi_reduction <add>, %12, %cst_8 [0] : vector<4x4x128xf32> to vector<4x128xf32>
    %14 = vector.shape_cast %13 : vector<4x128xf32> to vector<1x4x128xf32>
    %15 = tpu.reciprocal %14 {approx = true} : vector<1x4x128xf32> -> vector<1x4x128xf32>
    %16 = vector.broadcast %15 : vector<1x4x128xf32> to vector<4x4x128xf32>
    %17 = arith.mulf %12, %16 : vector<4x4x128xf32>
    %18 = tpu.iota {dimensions = array<i32: 0>} : vector<4x4x128xi32>
    %19 = vector.shape_cast %7 : vector<4x128xi32> to vector<1x4x128xi32>
    %20 = vector.broadcast %19 : vector<1x4x128xi32> to vector<4x4x128xi32>
    %21 = arith.cmpi eq, %20, %18 : vector<4x4x128xi32>
    %22 = arith.extui %21 : vector<4x4x128xi1> to vector<4x4x128xi32>
    %23 = arith.sitofp %22 : vector<4x4x128xi32> to vector<4x4x128xf32>
    %24 = arith.mulf %17, %23 : vector<4x4x128xf32>
    %25 = arith.addf %3, %24 : vector<4x4x128xf32>
    %26 = arith.mulf %17, %17 : vector<4x4x128xf32>
    %27 = arith.addf %3, %26 : vector<4x4x128xf32>
    %28 = arith.addf %3, %23 : vector<4x4x128xf32>
    %c0_9 = arith.constant 0 : index
    %c0_10 = arith.constant 0 : index
    %c0_11 = arith.constant 0 : index
    %c0_12 = arith.constant 0 : index
    %29 = vector.load %arg5[%c0_9, %c0_10, %c0_11, %c0_12] : memref<3x4x4x128xf32, #tpu.memory_space<vmem>>, vector<1x4x4x128xf32>
    %30 = vector.shape_cast %29 : vector<1x4x4x128xf32> to vector<4x4x128xf32>
    %31 = arith.addf %30, %25 : vector<4x4x128xf32>
    %c0_13 = arith.constant 0 : index
    %c0_14 = arith.constant 0 : index
    %c0_15 = arith.constant 0 : index
    %c0_16 = arith.constant 0 : index
    %32 = vector.load %arg5[%c0_13, %c0_14, %c0_15, %c0_16] : memref<3x4x4x128xf32, #tpu.memory_space<vmem>>, vector<1x4x4x128xf32>
    %33 = vector.shape_cast %32 : vector<1x4x4x128xf32> to vector<4x4x128xf32>
    %34 = vector.shape_cast %31 : vector<4x4x128xf32> to vector<1x4x4x128xf32>
    tpu.vector_store %arg5[%c0_13, %c0_14, %c0_15, %c0_16], %34 {strides = array<i32>} : memref<3x4x4x128xf32, #tpu.memory_space<vmem>>, vector<1x4x4x128xf32>,
    %c1 = arith.constant 1 : index
    %c0_17 = arith.constant 0 : index
    %c0_18 = arith.constant 0 : index
    %c0_19 = arith.constant 0 : index
    %35 = vector.load %arg5[%c1, %c0_17, %c0_18, %c0_19] : memref<3x4x4x128xf32, #tpu.memory_space<vmem>>, vector<1x4x4x128xf32>
    %36 = vector.shape_cast %35 : vector<1x4x4x128xf32> to vector<4x4x128xf32>
    %37 = arith.addf %36, %27 : vector<4x4x128xf32>
    %c1_20 = arith.constant 1 : index
    %c0_21 = arith.constant 0 : index
    %c0_22 = arith.constant 0 : index
    %c0_23 = arith.constant 0 : index
    %38 = vector.load %arg5[%c1_20, %c0_21, %c0_22, %c0_23] : memref<3x4x4x128xf32, #tpu.memory_space<vmem>>, vector<1x4x4x128xf32>
    %39 = vector.shape_cast %38 : vector<1x4x4x128xf32> to vector<4x4x128xf32>
    %40 = vector.shape_cast %37 : vector<4x4x128xf32> to vector<1x4x4x128xf32>
    tpu.vector_store %arg5[%c1_20, %c0_21, %c0_22, %c0_23], %40 {strides = array<i32>} : memref<3x4x4x128xf32, #tpu.memory_space<vmem>>, vector<1x4x4x128xf32>,
    %c2 = arith.constant 2 : index
    %c0_24 = arith.constant 0 : index
    %c0_25 = arith.constant 0 : index
    %c0_26 = arith.constant 0 : index
    %41 = vector.load %arg5[%c2, %c0_24, %c0_25, %c0_26] : memref<3x4x4x128xf32, #tpu.memory_space<vmem>>, vector<1x4x4x128xf32>
    %42 = vector.shape_cast %41 : vector<1x4x4x128xf32> to vector<4x4x128xf32>
    %43 = arith.addf %42, %28 : vector<4x4x128xf32>
    %c2_27 = arith.constant 2 : index
    %c0_28 = arith.constant 0 : index
    %c0_29 = arith.constant 0 : index
    %c0_30 = arith.constant 0 : index
    %44 = vector.load %arg5[%c2_27, %c0_28, %c0_29, %c0_30] : memref<3x4x4x128xf32, #tpu.memory_space<vmem>>, vector<1x4x4x128xf32>
    %45 = vector.shape_cast %44 : vector<1x4x4x128xf32> to vector<4x4x128xf32>
    %46 = vector.shape_cast %43 : vector<4x4x128xf32> to vector<1x4x4x128xf32>
    tpu.vector_store %arg5[%c2_27, %c0_28, %c0_29, %c0_30], %46 {strides = array<i32>} : memref<3x4x4x128xf32, #tpu.memory_space<vmem>>, vector<1x4x4x128xf32>,
    %c0_i32_31 = arith.constant 0 : i32
    %47 = arith.cmpi eq, %arg1, %c0_i32_31 : i32
    %48 = arith.extui %47 : i1 to i32
    %c0_i32_32 = arith.constant 0 : i32
    %49 = arith.cmpi ne, %48, %c0_i32_32 : i32
    scf.if %49 {
      %c0_33 = arith.constant 0 : index
      %c0_34 = arith.constant 0 : index
      %c0_35 = arith.constant 0 : index
      %c0_36 = arith.constant 0 : index
      %50 = vector.load %arg5[%c0_33, %c0_34, %c0_35, %c0_36] : memref<3x4x4x128xf32, #tpu.memory_space<vmem>>, vector<3x4x4x128xf32>
      %c0_37 = arith.constant 0 : index
      %c0_38 = arith.constant 0 : index
      %c0_39 = arith.constant 0 : index
      %c0_40 = arith.constant 0 : index
      %c0_41 = arith.constant 0 : index
      %51 = vector.load %arg4[%c0_37, %c0_38, %c0_39, %c0_40, %c0_41] : memref<1x3x4x4x128xf32, #tpu.memory_space<vmem>>, vector<1x3x4x4x128xf32>
      %52 = vector.shape_cast %51 : vector<1x3x4x4x128xf32> to vector<3x4x4x128xf32>
      %53 = vector.shape_cast %50 : vector<3x4x4x128xf32> to vector<1x3x4x4x128xf32>
      tpu.vector_store %arg4[%c0_37, %c0_38, %c0_39, %c0_40, %c0_41], %53 {strides = array<i32>} : memref<1x3x4x4x128xf32, #tpu.memory_space<vmem>>, vector<1x3x4x4x128xf32>,
    } else {
    }
    return
  }
  func.func @transform_0(%arg0: i32, %arg1: i32) -> (i32, i32, i32, i32) {
    %c0_i32 = arith.constant 0 : i32
    %c0_i32_0 = arith.constant 0 : i32
    %c0_i32_1 = arith.constant 0 : i32
    return %arg0, %c0_i32, %arg1, %c0_i32_0 : i32, i32, i32, i32
  }
  func.func @transform_1(%arg0: i32, %arg1: i32) -> (i32, i32, i32) {
    %c0_i32 = arith.constant 0 : i32
    %c0_i32_0 = arith.constant 0 : i32
    return %arg0, %arg1, %c0_i32 : i32, i32, i32
  }
  func.func @transform_2(%arg0: i32, %arg1: i32) -> (i32, i32, i32, i32, i32) {
    %c0_i32 = arith.constant 0 : i32
    %c0_i32_0 = arith.constant 0 : i32
    %c0_i32_1 = arith.constant 0 : i32
    %c0_i32_2 = arith.constant 0 : i32
    %c0_i32_3 = arith.constant 0 : i32
    return %arg0, %c0_i32, %c0_i32_0, %c0_i32_1, %c0_i32_2 : i32, i32, i32, i32, i32
  }
}

</mosaic_0001>

<llo_original>
// kernel: dice_loss.1
$region0: #{dice_loss.1}
  #allocation0 [shape = 'u32[]', space=smem, size = 0x4, offset = 0x4, fixed_abs, tag = 'smem constant byte address 0x4 - core index']
  #allocation1 [shape = 'u32[72,128]{1,0:T(1,128)}', space=vmem, size = 0x9000, scoped, tag = 'internal scratch']
  #allocation2 [shape = 'f32[3,4,4,128]{3,2,1,0:T(4,128)}', space=vmem, size = 0x6000, scoped, tag = 'scratch operand']
  %s0 = inlined_call_operand.vmem [shape: f32[2,4,4,128], index: 0, kind: input, shape index: {}]
  %s1 = inlined_call_operand.vmem [shape: s32[2,4,128], index: 1, kind: input, shape index: {}]
  %s2 = inlined_call_operand.vmem [shape: f32[2,3,4,4,128], index: 2, kind: output, shape index: {}]
  %s3 = sld [smem:[#allocation0]]
  $region49: #{dice_loss.1} parent=0
    _
  %s5 = ssub.s32 1, %s3
  %s6 = scalar_select 0, %s5, %s3
  loop: start=0, step=1, limit=4
  $region2: #{dice_loss.1} parent=0 // loop_pre_header
    _
  $region3: #{dice_loss.1} parent=0 // loop_header
    %s8 = sphi 0, %s12
    %p9 = scmp.ge.s32.totalorder %s8, 4
    %s15 = sphi 0, %s27
    %s16 = sphi 0, %s23
    %s17 = sphi 0, %s15
    %s18 = sphi 0, %s16
    %s19 = sphi 0, %s17
    %s20 = sphi 0, %s18
    %s32 = sphi 0, %s34
    %s35 = sphi 0, %s32
    %s36 = sphi 0, %s35
    %s52 = sphi 0, %s36
    %s60 = sphi 0, %s62
    %s63 = sphi 0, %s60
    %s64 = sphi 0, %s63
    %s80 = sphi 0, %s64
    %s86 = sphi 0, %s88
    %s89 = sphi 0, %s86
    %s90 = sphi 0, %s89
    %s106 = sphi 0, %s90
  $region4: #{dice_loss.1} parent=0 // loop_header_branch
    %11 = sbr.rel (%p9) target = $region8
  $region5: #{dice_loss.1} parent=0 // loop_body
    %s13 = ssub.s32 %s8, 1
    %s14 = ssub.s32 %s8, 2
    %s21 = sadd.s32 1, %s16
    %p22 = scmp.ge.s32.totalorder %s21, 1
    %s23 = scalar_select %p22, 0, %s21
    %s24 = sadd.s32 1, %s15
    %s25 = scalar_select %p22, %s24, %s15
    %p26 = scmp.ge.s32.totalorder %s25, 2
    %s27 = scalar_select %p26, 0, %s25
    %s28 = ssub.s32 %s15, %s27
    %s29 = ssub.s32 %s16, %s23
    %s30 = sor.u32 %s28, %s29
    %p31 = scmp.eq.s32.totalorder %s30, 0
    %s33 = sadd.s32 %s32, 1
    %s34 = scalar_select %p31, %s32, %s33
    %p37 = pneg %p31
    %p38 = scmp.eq.s32.totalorder %s8, 1
    %p39 = por %p37, %p38
    %p40 = scmp.ne.s32.totalorder %s32, %s35
    %p41 = scmp.eq.s32.totalorder %s8, 0
    %p42 = por %p40, %p41
    %p43 = scmp.ne.s32.totalorder %s32, %s35
    %p44 = scmp.eq.s32.totalorder %s13, 1
    %p45 = por %p43, %p44
    %p46 = scmp.ne.s32.totalorder %s35, %s36
    %p47 = scmp.eq.s32.totalorder %s13, 0
    %p48 = por %p46, %p47
    %p49 = scmp.ne.s32.totalorder %s35, %s36
    %p50 = scmp.eq.s32.totalorder %s14, 1
    %p51 = por %p49, %p50
    %p53 = scmp.ne.s32.totalorder %s36, %s52
    %p54 = scmp.eq.s32.totalorder %s14, 0
    %p55 = por %p53, %p54
    %s56 = ssub.s32 %s15, %s27
    %s57 = ssub.s32 %s16, %s23
    %s58 = sor.u32 %s56, %s57
    %p59 = scmp.eq.s32.totalorder %s58, 0
    %s61 = sadd.s32 %s60, 1
    %s62 = scalar_select %p59, %s60, %s61
    %p65 = pneg %p59
    %p66 = scmp.eq.s32.totalorder %s8, 1
    %p67 = por %p65, %p66
    %p68 = scmp.ne.s32.totalorder %s60, %s63
    %p69 = scmp.eq.s32.totalorder %s8, 0
    %p70 = por %p68, %p69
    %p71 = scmp.ne.s32.totalorder %s60, %s63
    %p72 = scmp.eq.s32.totalorder %s13, 1
    %p73 = por %p71, %p72
    %p74 = scmp.ne.s32.totalorder %s63, %s64
    %p75 = scmp.eq.s32.totalorder %s13, 0
    %p76 = por %p74, %p75
    %p77 = scmp.ne.s32.totalorder %s63, %s64
    %p78 = scmp.eq.s32.totalorder %s14, 1
    %p79 = por %p77, %p78
    %p81 = scmp.ne.s32.totalorder %s64, %s80
    %p82 = scmp.eq.s32.totalorder %s14, 0
    %p83 = por %p81, %p82
    %s84 = ssub.s32 %s15, %s27
    %p85 = scmp.eq.s32.totalorder %s84, 0
    %s87 = sadd.s32 %s86, 1
    %s88 = scalar_select %p85, %s86, %s87
    %p91 = pneg %p85
    %p92 = scmp.eq.s32.totalorder %s8, 1
    %p93 = por %p91, %p92
    %p94 = scmp.ne.s32.totalorder %s86, %s89
    %p95 = scmp.eq.s32.totalorder %s8, 0
    %p96 = por %p94, %p95
    %p97 = scmp.ne.s32.totalorder %s86, %s89
    %p98 = scmp.eq.s32.totalorder %s13, 1
    %p99 = por %p97, %p98
    %p100 = scmp.ne.s32.totalorder %s89, %s90
    %p101 = scmp.eq.s32.totalorder %s13, 0
    %p102 = por %p100, %p101
    %p103 = scmp.ne.s32.totalorder %s89, %s90
    %p104 = scmp.eq.s32.totalorder %s14, 1
    %p105 = por %p103, %p104
    %p107 = scmp.ne.s32.totalorder %s90, %s106
    %p108 = scmp.eq.s32.totalorder %s14, 0
    %p109 = por %p107, %p108
    %p110 = scmp.le.s32.totalorder 1, %s8
    %p111 = scmp.lt.s32.totalorder %s8, 3
    %p112 = pnand %p110, %p111
    %p113 = pneg %p112
    // Predicated region
    $region9: #{dice_loss.1} parent=5 // pred_check
      _
    $region10: #{dice_loss.1} parent=5 // pred_check_branch
      %115 = sbr.rel (%p112) target = $region12
    $region11: #{dice_loss.1} parent=5 // pred_region
      %s116 = ssub.s32 %s8, 1
    $region12: #{dice_loss.1} parent=5 // pred_fallthru
      _
    %p117 = scmp.lt.s32.totalorder %s8, 2
    // Predicated region
    $region13: #{dice_loss.1} parent=5 // pred_check
      %p118 = pneg %p117
    $region14: #{dice_loss.1} parent=5 // pred_check_branch
      %120 = sbr.rel (%p118) target = $region16
    $region15: #{dice_loss.1} parent=5 // pred_region
      // Predicated region
      $region17: #{dice_loss.1} parent=15 // pred_check
        %p121 = pneg %p42
      $region18: #{dice_loss.1} parent=15 // pred_check_branch
        %123 = sbr.rel (%p121) target = $region20
      $region19: #{dice_loss.1} parent=15 // pred_region
        %p124 = scmp.lt.s32.totalorder %s15, 1
        %s125 = scalar_select %p124, %s15, 1
        %p126 = scmp.lt.s32.totalorder %s16, 0
        %s127 = scalar_select %p126, %s16, 0
        %s128 = smul.addr %s125, 4
        %s129 = sadd.s32 %s127, %s128
        %s130 = smul.addr %s129, 4
        %s131 = scalar_lea.vmem %s0, %s130
      $region20: #{dice_loss.1} parent=15 // pred_fallthru
        _
      // Predicated region
      $region21: #{dice_loss.1} parent=15 // pred_check
        %p132 = pneg %p70
      $region22: #{dice_loss.1} parent=15 // pred_check_branch
        %134 = sbr.rel (%p132) target = $region24
      $region23: #{dice_loss.1} parent=15 // pred_region
        %p135 = scmp.lt.s32.totalorder %s15, 1
        %s136 = scalar_select %p135, %s15, 1
        %p137 = scmp.lt.s32.totalorder %s16, 0
        %s138 = scalar_select %p137, %s16, 0
        %s139 = sadd.s32 %s138, %s136
        %s140 = smul.addr %s139, 4
        %s141 = scalar_lea.vmem %s1, %s140
      $region24: #{dice_loss.1} parent=15 // pred_fallthru
        _
    $region16: #{dice_loss.1} parent=5 // pred_fallthru
      _
    %p142 = scmp.le.s32.totalorder 1, %s8
    %p143 = scmp.lt.s32.totalorder %s8, 3
    %p144 = pnand %p142, %p143
    %p145 = pneg %p144
    // Predicated region
    $region25: #{dice_loss.1} parent=5 // pred_check
      _
    $region26: #{dice_loss.1} parent=5 // pred_check_branch
      %147 = sbr.rel (%p144) target = $region28
    $region27: #{dice_loss.1} parent=5 // pred_region
      %s148 = ssub.s32 %s8, 1
      %p149 = scmp.lt.s32.totalorder %s17, 1
      %s150 = scalar_select %p149, %s17, 1
      %p151 = scmp.lt.s32.totalorder %s18, 0
      %s152 = scalar_select %p151, %s18, 0
      %s153 = smul.addr %s150, 4
      %s154 = sadd.s32 %s152, %s153
      %s155 = smul.addr %s154, 4
      %s156 = scalar_lea.vmem %s0, %s155
      %p157 = pneg %p48
      %p158 = pneg %p45
      %p159 = scmp.lt.s32.totalorder %s17, 1
      %s160 = scalar_select %p159, %s17, 1
      %p161 = scmp.lt.s32.totalorder %s18, 0
      %s162 = scalar_select %p161, %s18, 0
      %s163 = sadd.s32 %s162, %s160
      %s164 = smul.addr %s163, 4
      %s165 = scalar_lea.vmem %s1, %s164
      %p166 = pneg %p76
      %p167 = pneg %p73
      %p168 = pneg %p102
      %p169 = pneg %p99
      %p170 = scmp.lt.s32.totalorder %s17, 1
      %s171 = scalar_select %p170, %s17, 1
      %s172 = smul.addr %s171, 12
      %s173 = smul.addr %s172, 4
      %s174 = scalar_lea.vmem %s2, %s173
      %p175 = scmp.lt.s32.totalorder %s17, 1
      %s176 = scalar_select %p175, %s17, 1
      %p177 = scmp.lt.s32.totalorder %s18, 0
      %s178 = scalar_select %p177, %s18, 0
      %s179 = smul.addr %s176, 4
      %s180 = sadd.s32 %s178, %s179
      %s181 = smul.addr %s180, 4
      %s182 = scalar_lea.vmem %s0, %s181
      %p183 = scmp.lt.s32.totalorder %s17, 1
      %s184 = scalar_select %p183, %s17, 1
      %p185 = scmp.lt.s32.totalorder %s18, 0
      %s186 = scalar_select %p185, %s18, 0
      %s187 = sadd.s32 %s186, %s184
      %s188 = smul.addr %s187, 4
      %s189 = scalar_lea.vmem %s1, %s188
      %p190 = scmp.lt.s32.totalorder %s17, 1
      %s191 = scalar_select %p190, %s17, 1
      %s192 = smul.addr %s191, 12
      %s193 = smul.addr %s192, 4
      %s194 = scalar_lea.vmem %s2, %s193
      %p195 = scmp.eq.s32.totalorder %s18, 0
      // Predicated region
      $region29: #{dice_loss.1} parent=27 // pred_check
        %p196 = pneg %p195
      $region30: #{dice_loss.1} parent=27 // pred_check_branch
        %198 = sbr.rel (%p196) target = $region32
      $region31: #{dice_loss.1} parent=27 // pred_region
        %199 = vst [vmem:[#allocation2] sm:$0xf] 0.0
        %200 = vst [vmem:[#allocation2 + $0x4] sm:$0xf] 0.0
        %201 = vst [vmem:[#allocation2 + $0x8] sm:$0xf] 0.0
        %202 = vst [vmem:[#allocation2 + $0xc] sm:$0xf] 0.0
        %203 = vst [vmem:[#allocation2 + $0x10] sm:$0xf] 0.0
        %204 = vst [vmem:[#allocation2 + $0x14] sm:$0xf] 0.0
        %205 = vst [vmem:[#allocation2 + $0x18] sm:$0xf] 0.0
        %206 = vst [vmem:[#allocation2 + $0x1c] sm:$0xf] 0.0
        %207 = vst [vmem:[#allocation2 + $0x20] sm:$0xf] 0.0
        %208 = vst [vmem:[#allocation2 + $0x24] sm:$0xf] 0.0
        %209 = vst [vmem:[#allocation2 + $0x28] sm:$0xf] 0.0
        %210 = vst [vmem:[#allocation2 + $0x2c] sm:$0xf] 0.0
      $region32: #{dice_loss.1} parent=27 // pred_fallthru
        _
      %v211 = vld [vmem:[%s182] sm:$0xf]
      %v212 = vld [vmem:[%s182 + $0x4] sm:$0xf]
      %v213 = vld [vmem:[%s182 + $0x8] sm:$0xf]
      %v214 = vld [vmem:[%s182 + $0xc] sm:$0xf]
      %v215 = vld [vmem:[%s189] sm:$0xf]
      %vm216 = vcmask 1043456
      %v217 = vsel %vm216, %v211, -inf
      %v218 = vsel %vm216, %v212, -inf
      %v219 = vsel %vm216, %v213, -inf
      %v220 = vsel %vm216, %v214, -inf
      %v221 = vmax.f32 %v217, %v218
      %v222 = vmax.f32 %v219, %v220
      %v223 = vmax.f32 %v221, %v222
      %v224 = vsub.f32 %v211, %v223
      %v225 = vsub.f32 %v212, %v223
      %v226 = vsub.f32 %v213, %v223
      %v227 = vsub.f32 %v214, %v223
      %v228 = vmul.f32 %v224, 1.442695
      %v229 = vpow.pop %v228
      %v230 = vmul.f32 %v225, 1.442695
      %v231 = vpow.pop %v230
      %v232 = vmul.f32 %v226, 1.442695
      %v233 = vpow.pop %v232
      %v234 = vmul.f32 %v227, 1.442695
      %v235 = vpow.pop %v234
      %v236 = vsel %vm216, %v229, 0.0
      %v237 = vsel %vm216, %v231, 0.0
      %v238 = vadd.f32 %v236, %v237
      %v239 = vsel %vm216, %v233, 0.0
      %v240 = vadd.f32 %v238, %v239
      %v241 = vsel %vm216, %v235, 0.0
      %v242 = vadd.f32 %v240, %v241
      %v243 = vrcp.pop %v242
      %v244 = vmul.f32 %v229, %v243
      %v245 = vmul.f32 %v231, %v243
      %v246 = vmul.f32 %v233, %v243
      %v247 = vmul.f32 %v235, %v243
      %vm248 = vcmp.eq.s32.totalorder %v215, 0
      %vm249 = vcmp.eq.s32.totalorder %v215, 1
      %vm250 = vcmp.eq.s32.totalorder %v215, 2
      %vm251 = vcmp.eq.s32.totalorder %v215, 3
      %v252 = vsel %vm248, 1, 0
      %v253 = vsel %vm249, 1, 0
      %v254 = vsel %vm250, 1, 0
      %v255 = vsel %vm251, 1, 0
      %v256 = vcvt.s32.f32 %v252
      %v257 = vcvt.s32.f32 %v253
      %v258 = vcvt.s32.f32 %v254
      %v259 = vcvt.s32.f32 %v255
      %v260 = vmul.f32 %v244, %v256
      %v261 = vmul.f32 %v245, %v257
      %v262 = vmul.f32 %v246, %v258
      %v263 = vmul.f32 %v247, %v259
      %v264 = vadd.f32 %v260, 0.0
      %v265 = vadd.f32 %v261, 0.0
      %v266 = vadd.f32 %v262, 0.0
      %v267 = vadd.f32 %v263, 0.0
      %v268 = vmul.f32 %v244, %v244
      %v269 = vmul.f32 %v245, %v245
      %v270 = vmul.f32 %v246, %v246
      %v271 = vmul.f32 %v247, %v247
      %v272 = vadd.f32 %v268, 0.0
      %v273 = vadd.f32 %v269, 0.0
      %v274 = vadd.f32 %v270, 0.0
      %v275 = vadd.f32 %v271, 0.0
      %v276 = vadd.f32 %v256, 0.0
      %v277 = vadd.f32 %v257, 0.0
      %v278 = vadd.f32 %v258, 0.0
      %v279 = vadd.f32 %v259, 0.0
      %v280 = vld [vmem:[#allocation2] sm:$0xf]
      %v281 = vld [vmem:[#allocation2 + $0x4] sm:$0xf]
      %v282 = vld [vmem:[#allocation2 + $0x8] sm:$0xf]
      %v283 = vld [vmem:[#allocation2 + $0xc] sm:$0xf]
      %v284 = vadd.f32 %v280, %v264
      %v285 = vadd.f32 %v281, %v265
      %v286 = vadd.f32 %v282, %v266
      %v287 = vadd.f32 %v283, %v267
      %288 = vst [vmem:[#allocation2] sm:$0xf] %v284
      %289 = vst [vmem:[#allocation2 + $0x4] sm:$0xf] %v285
      %290 = vst [vmem:[#allocation2 + $0x8] sm:$0xf] %v286
      %291 = vst [vmem:[#allocation2 + $0xc] sm:$0xf] %v287
      %s292 = scalar_lea.vmem [#allocation2], 16
      %v293 = vld [vmem:[%s292] sm:$0xf]
      %v294 = vld [vmem:[%s292 + $0x4] sm:$0xf]
      %v295 = vld [vmem:[%s292 + $0x8] sm:$0xf]
      %v296 = vld [vmem:[%s292 + $0xc] sm:$0xf]
      %v297 = vadd.f32 %v293, %v272
      %v298 = vadd.f32 %v294, %v273
      %v299 = vadd.f32 %v295, %v274
      %v300 = vadd.f32 %v296, %v275
      %301 = vst [vmem:[%s292] sm:$0xf] %v297
      %302 = vst [vmem:[%s292 + $0x4] sm:$0xf] %v298
      %303 = vst [vmem:[%s292 + $0x8] sm:$0xf] %v299
      %304 = vst [vmem:[%s292 + $0xc] sm:$0xf] %v300
      %s305 = scalar_lea.vmem [#allocation2], 32
      %v306 = vld [vmem:[%s305] sm:$0xf]
      %v307 = vld [vmem:[%s305 + $0x4] sm:$0xf]
      %v308 = vld [vmem:[%s305 + $0x8] sm:$0xf]
      %v309 = vld [vmem:[%s305 + $0xc] sm:$0xf]
      %v310 = vadd.f32 %v306, %v276
      %v311 = vadd.f32 %v307, %v277
      %v312 = vadd.f32 %v308, %v278
      %v313 = vadd.f32 %v309, %v279
      %314 = vst [vmem:[%s305] sm:$0xf] %v310
      %315 = vst [vmem:[%s305 + $0x4] sm:$0xf] %v311
      %316 = vst [vmem:[%s305 + $0x8] sm:$0xf] %v312
      %317 = vst [vmem:[%s305 + $0xc] sm:$0xf] %v313
      // Predicated region
      $region33: #{dice_loss.1} parent=27 // pred_check
        %p318 = pneg %p195
      $region34: #{dice_loss.1} parent=27 // pred_check_branch
        %320 = sbr.rel (%p318) target = $region36
      $region35: #{dice_loss.1} parent=27 // pred_region
        %v321 = vld [vmem:[#allocation2] sm:$0xf]
        %v322 = vld [vmem:[#allocation2 + $0x4] sm:$0xf]
        %v323 = vld [vmem:[#allocation2 + $0x8] sm:$0xf]
        %v324 = vld [vmem:[#allocation2 + $0xc] sm:$0xf]
        %v325 = vld [vmem:[#allocation2 + $0x10] sm:$0xf]
        %v326 = vld [vmem:[#allocation2 + $0x14] sm:$0xf]
        %v327 = vld [vmem:[#allocation2 + $0x18] sm:$0xf]
        %v328 = vld [vmem:[#allocation2 + $0x1c] sm:$0xf]
        %v329 = vld [vmem:[#allocation2 + $0x20] sm:$0xf]
        %v330 = vld [vmem:[#allocation2 + $0x24] sm:$0xf]
        %v331 = vld [vmem:[#allocation2 + $0x28] sm:$0xf]
        %v332 = vld [vmem:[#allocation2 + $0x2c] sm:$0xf]
        %333 = vst [vmem:[%s194] sm:$0xf] %v321
        %334 = vst [vmem:[%s194 + $0x4] sm:$0xf] %v322
        %335 = vst [vmem:[%s194 + $0x8] sm:$0xf] %v323
        %336 = vst [vmem:[%s194 + $0xc] sm:$0xf] %v324
        %337 = vst [vmem:[%s194 + $0x10] sm:$0xf] %v325
        %338 = vst [vmem:[%s194 + $0x14] sm:$0xf] %v326
        %339 = vst [vmem:[%s194 + $0x18] sm:$0xf] %v327
        %340 = vst [vmem:[%s194 + $0x1c] sm:$0xf] %v328
        %341 = vst [vmem:[%s194 + $0x20] sm:$0xf] %v329
        %342 = vst [vmem:[%s194 + $0x24] sm:$0xf] %v330
        %343 = vst [vmem:[%s194 + $0x28] sm:$0xf] %v331
        %344 = vst [vmem:[%s194 + $0x2c] sm:$0xf] %v332
      $region36: #{dice_loss.1} parent=27 // pred_fallthru
        _
      %p345 = scmp.lt.s32.totalorder %s17, 1
      %s346 = scalar_select %p345, %s17, 1
      %s347 = smul.addr %s346, 12
      %s348 = smul.addr %s347, 4
      %s349 = scalar_lea.vmem %s2, %s348
      // Predicated region
      $region37: #{dice_loss.1} parent=27 // pred_check
        %p350 = pneg %p99
      $region38: #{dice_loss.1} parent=27 // pred_check_branch
        %352 = sbr.rel (%p350) target = $region40
      $region39: #{dice_loss.1} parent=27 // pred_region
        _
      $region40: #{dice_loss.1} parent=27 // pred_fallthru
        _
    $region28: #{dice_loss.1} parent=5 // pred_fallthru
      _
    %p353 = scmp.le.s32.totalorder 2, %s8
    // Predicated region
    $region41: #{dice_loss.1} parent=5 // pred_check
      %p354 = pneg %p353
    $region42: #{dice_loss.1} parent=5 // pred_check_branch
      %356 = sbr.rel (%p354) target = $region44
    $region43: #{dice_loss.1} parent=5 // pred_region
      %s357 = ssub.s32 %s8, 2
      // Predicated region
      $region45: #{dice_loss.1} parent=43 // pred_check
        %p358 = pneg %p105
      $region46: #{dice_loss.1} parent=43 // pred_check_branch
        %360 = sbr.rel (%p358) target = $region48
      $region47: #{dice_loss.1} parent=43 // pred_region
        %p361 = scmp.lt.s32.totalorder %s19, 1
        %s362 = scalar_select %p361, %s19, 1
        %s363 = smul.addr %s362, 12
        %s364 = smul.addr %s363, 4
        %s365 = scalar_lea.vmem %s2, %s364
      $region48: #{dice_loss.1} parent=43 // pred_fallthru
        _
    $region44: #{dice_loss.1} parent=5 // pred_fallthru
      _
  $region6: #{dice_loss.1} parent=0 // loop_footer
    %s12 = sadd.s32 1, %s8
  $region7: #{dice_loss.1} parent=0 // loop_footer_branch
    %7 = sbr.rel target = $region3
  $region8: #{dice_loss.1} parent=0 // loop_exit
    _

</llo_original>
